<compile_context>
chip_gen: v6e
topology: v6e:2x2x1
jax: 0.10.0
libtpu: 0.0.40
codegen_flags: <defaults>
</compile_context>

<pallas_src>
import functools

import jax
import jax.numpy as jnp
from jax import lax
from jax.experimental import pallas as pl
from jax.experimental.pallas import tpu as pltpu


def _round_up(x, m):
    return (x + m - 1) // m * m


def _fused_embed_kernel(x_ref, tbl_ref, out_ref, *, k_pad):
    """x_ref: (TB, F) int32 (pre-shifted); tbl_ref: (K_pad, D_pad) f32;
    out_ref: (TB, D_pad) f32."""
    tb, num_feat = x_ref.shape

    # One shared lane iota over the fused (block-diagonal) vocab axis.
    iota = lax.broadcasted_iota(jnp.int32, (tb, k_pad), 1)            # (TB, K_pad)

    # Combined one-hot: F compares OR'ed together (features occupy disjoint
    # vocab ranges, so at most one hit per output column range).
    hit = iota == x_ref[:, 0:1]
    for i in range(1, num_feat):
        hit = hit | (iota == x_ref[:, i:i + 1])
    onehot = hit.astype(tbl_ref.dtype)

    # Single block-diagonal gather-as-matmul on the MXU, one lane-dense store.
    # Note: out-of-range indices silently produce zero rows (torch would raise).
    out_ref[...] = jnp.dot(
        onehot, tbl_ref[...], preferred_element_type=jnp.float32
    ).astype(out_ref.dtype)


def _choose_tile_b(B, k_pad, d_pad, requested, vmem_budget=24 << 20):
    """Largest 8-aligned batch tile that (with the resident table, double
    buffers and the one-hot intermediate) stays inside a VMEM budget."""
    itemsize = 4
    table_bytes = 2 * k_pad * d_pad * itemsize          # resident (worst case 2x)
    # per-row bytes: x tile (lane-padded to 128) + out tile, double-buffered,
    # plus the one-hot / compare intermediates (~2x k_pad).
    per_row = itemsize * (2 * 128 + 2 * d_pad + 2 * k_pad)
    avail = max(vmem_budget - table_bytes, per_row * 8)
    max_tile = max(8, (avail // per_row) // 8 * 8)
    tile = max(8, min(int(requested), _round_up(B, 8), max_tile))
    return _round_up(tile, 8)


def cat_embedding_sqrt(x_cat, tables, categories, d_embed_list, tile_b=256,
                       table_dtype=jnp.float32):
    """Equivalent of CatEmbeddingSqrt.forward: (B, F) int -> (B, d_cat_sum) f32."""
    B, F = x_cat.shape
    assert F == len(categories) == len(tables) == len(d_embed_list)
    d_cat_sum = int(sum(d_embed_list))

    # ---- Fused block-diagonal table (K_pad, D_pad), lane/sublane aligned. ----
    # TODO(synk): for production-scale vocabularies, keep the tables in HBM
    # (memory_space=pl.ANY) and do a manual DMA row-gather instead of the
    # one-hot matmul; this VMEM-resident path is sized for small/medium vocabs.
    k_total = int(sum(categories))
    k_pad = _round_up(k_total, 128)
    d_pad = _round_up(max(d_cat_sum, 128), 128)
    fused = jnp.zeros((k_pad, d_pad), table_dtype)
    vocab_offsets = []
    r = c = 0
    for t, v, d in zip(tables, categories, d_embed_list):
        vocab_offsets.append(r)
        fused = fused.at[r:r + v, c:c + d].set(t.astype(table_dtype))
        r += v
        c += d
    offs = jnp.asarray(vocab_offsets, jnp.int32)

    # ---- Pre-shift indices once in XLA; tile & pad the batch. ----
    x = x_cat.astype(jnp.int32) + offs[None, :]
    tile_b = _choose_tile_b(B, k_pad, d_pad, tile_b)
    b_pad = _round_up(B, tile_b)
    if b_pad != B:
        # Padded rows hit the zero-padded tail of the fused table -> zeros.
        pad_val = k_total if k_pad > k_total else 0
        x = jnp.pad(x, ((0, b_pad - B), (0, 0)), constant_values=pad_val)

    kernel = functools.partial(_fused_embed_kernel, k_pad=k_pad)

    itemsize = 4
    table_bytes = k_pad * d_pad * itemsize
    per_row = itemsize * (2 * 128 + 2 * d_pad + 2 * k_pad)
    vmem_need = 2 * table_bytes + tile_b * per_row
    vmem_limit = int(min(48 << 20, max(2 * vmem_need, 16 << 20)))

    cost = pl.CostEstimate(
        flops=2 * b_pad * k_pad * d_pad,
        transcendentals=0,
        bytes_accessed=b_pad * F * 4 + table_bytes + b_pad * d_pad * 4,
    )

    out = pl.pallas_call(
        kernel,
        out_shape=jax.ShapeDtypeStruct((b_pad, d_pad), jnp.float32),
        grid=(b_pad // tile_b,),
        in_specs=[
            pl.BlockSpec((tile_b, F), lambda b: (b, 0)),
            # Fused table: full-array block, same block for every batch tile
            # (constant index_map => stays resident in VMEM).
            pl.BlockSpec((k_pad, d_pad), lambda b: (0, 0)),
        ],
        out_specs=pl.BlockSpec((tile_b, d_pad), lambda b: (b, 0)),
        compiler_params=pltpu.CompilerParams(
            dimension_semantics=("parallel",),
            vmem_limit_bytes=vmem_limit),
        cost_estimate=cost,
    )(x, fused)

    # Slice away batch padding and the lane padding past d_cat_sum.
    return out[:B, :d_cat_sum]


if __name__ == "__main__":
    # Module config: d_embed_list = [10, 9, 8, 5]  ->  d_cat_sum = 32
    categories = [100, 81, 64, 25]
    d_embed_max = 100
    d_embed_list = [min(max(int(c ** 0.5), 2), d_embed_max) for c in categories]
    d_cat_sum = sum(d_embed_list)
    assert d_cat_sum == 32

    num_features = len(categories)
    key = jax.random.PRNGKey(0)
    k_idx, *k_tables = jax.random.split(key, 1 + num_features)

    # Deterministic synthetic parameters (nn.Embedding default init ~ N(0, 1)).
    tables = [
        jax.random.normal(k_tables[i], (categories[i], d_embed_list[i]),
                          dtype=jnp.float32)
        for i in range(num_features)
    ]

    def make_x(batch):
        cols = []
        for i in range(num_features):
            ki = jax.random.fold_in(k_idx, i)
            cols.append(jax.random.randint(ki, (batch, 1), 0, categories[i],
                                           dtype=jnp.int32))
        return jnp.concatenate(cols, axis=1)   # (batch, num_features) int32

    ok = True
    for batch in (32, 19):   # tile-aligned and ragged batch sizes
        x_cat = make_x(batch)
        out = jax.block_until_ready(
            cat_embedding_sqrt(x_cat, tables, categories, d_embed_list))
        ref = jnp.concatenate(
            [tables[i][x_cat[:, i]] for i in range(num_features)], axis=1)
        ok &= out.shape == (batch, d_cat_sum)
        ok &= bool(jnp.allclose(out, ref, atol=1e-5, rtol=1e-5))

    assert ok
    print("KERNEL_OK")
</pallas_src>

<mosaic_0001>
module attributes {stable_mosaic.version = 11 : i64} {
  func.func @_fused_embed_kernel(%arg0: i32, %arg1: memref<32x4xi32, #tpu.memory_space<vmem>>, %arg2: memref<384x128xf32, #tpu.memory_space<vmem>>, %arg3: memref<32x128xf32, #tpu.memory_space<vmem>>) attributes {dimension_semantics = [#tpu.dimension_semantics<parallel>], iteration_bounds = array<i64: 1>, scalar_prefetch = 0 : i64, scratch_operands = 0 : i64, tpu.core_type = #tpu.core_type<tc>, window_params = [{transform_indices = @transform_0, window_bounds = array<i64: 32, 4>}, {pipeline_mode = #tpu.pipeline_mode<synchronous>, transform_indices = @transform_1, window_bounds = array<i64: 384, 128>}, {transform_indices = @transform_2, window_bounds = array<i64: 32, 128>}]} {
    %0 = tpu.iota {dimensions = array<i32: 1>} : vector<32x384xi32>
    %c0 = arith.constant 0 : index
    %c0_0 = arith.constant 0 : index
    %1 = vector.load %arg1[%c0, %c0_0] : memref<32x4xi32, #tpu.memory_space<vmem>>, vector<32x1xi32>
    %2 = vector.broadcast %1 : vector<32x1xi32> to vector<32x384xi32>
    %3 = arith.cmpi eq, %0, %2 : vector<32x384xi32>
    %c0_1 = arith.constant 0 : index
    %c1 = arith.constant 1 : index
    %4 = vector.load %arg1[%c0_1, %c1] : memref<32x4xi32, #tpu.memory_space<vmem>>, vector<32x1xi32>
    %5 = vector.broadcast %4 : vector<32x1xi32> to vector<32x384xi32>
    %6 = arith.cmpi eq, %0, %5 : vector<32x384xi32>
    %7 = arith.ori %3, %6 : vector<32x384xi1>
    %c0_2 = arith.constant 0 : index
    %c2 = arith.constant 2 : index
    %8 = vector.load %arg1[%c0_2, %c2] : memref<32x4xi32, #tpu.memory_space<vmem>>, vector<32x1xi32>
    %9 = vector.broadcast %8 : vector<32x1xi32> to vector<32x384xi32>
    %10 = arith.cmpi eq, %0, %9 : vector<32x384xi32>
    %11 = arith.ori %7, %10 : vector<32x384xi1>
    %c0_3 = arith.constant 0 : index
    %c3 = arith.constant 3 : index
    %12 = vector.load %arg1[%c0_3, %c3] : memref<32x4xi32, #tpu.memory_space<vmem>>, vector<32x1xi32>
    %13 = vector.broadcast %12 : vector<32x1xi32> to vector<32x384xi32>
    %14 = arith.cmpi eq, %0, %13 : vector<32x384xi32>
    %15 = arith.ori %11, %14 : vector<32x384xi1>
    %16 = arith.extui %15 : vector<32x384xi1> to vector<32x384xi32>
    %17 = arith.sitofp %16 : vector<32x384xi32> to vector<32x384xf32>
    %c0_4 = arith.constant 0 : index
    %c0_5 = arith.constant 0 : index
    %18 = vector.load %arg2[%c0_4, %c0_5] : memref<384x128xf32, #tpu.memory_space<vmem>>, vector<384x128xf32>
    %cst = arith.constant dense<0.000000e+00> : vector<32x128xf32>
    %19 = tpu.matmul %17, %18, %cst {dimension_numbers = #tpu.dot_dimension_numbers<[1], [0], [0], [1], [0, 0, 1, 1], [], []>} : vector<32x384xf32>, vector<384x128xf32>, vector<32x128xf32> -> vector<32x128xf32>
    %c0_6 = arith.constant 0 : index
    %c0_7 = arith.constant 0 : index
    %20 = vector.load %arg3[%c0_6, %c0_7] : memref<32x128xf32, #tpu.memory_space<vmem>>, vector<32x128xf32>
    tpu.vector_store %arg3[%c0_6, %c0_7], %19 {strides = array<i32>} : memref<32x128xf32, #tpu.memory_space<vmem>>, vector<32x128xf32>,
    return
  }
  func.func @transform_0(%arg0: i32) -> (i32, i32) {
    %c0_i32 = arith.constant 0 : i32
    %c0_i32_0 = arith.constant 0 : i32
    return %arg0, %c0_i32 : i32, i32
  }
  func.func @transform_1(%arg0: i32) -> (i32, i32) {
    %c0_i32 = arith.constant 0 : i32
    %c0_i32_0 = arith.constant 0 : i32
    %c0_i32_1 = arith.constant 0 : i32
    return %c0_i32, %c0_i32_0 : i32, i32
  }
  func.func @transform_2(%arg0: i32) -> (i32, i32) {
    %c0_i32 = arith.constant 0 : i32
    %c0_i32_0 = arith.constant 0 : i32
    return %arg0, %c0_i32 : i32, i32
  }
}

</mosaic_0001>

<llo_original>
// kernel: tpu_custom_call.1
$region0: #{tpu_custom_call.1}
  #allocation0 [shape = 'u32[]', space=smem, size = 0x4, offset = 0x4, fixed_abs, tag = 'smem constant byte address 0x4 - core index']
  #allocation1 [shape = 'u32[144,128]{1,0:T(1,128)}', space=vmem, size = 0x12000, scoped, tag = 'internal scratch']
  %s0 = inlined_call_operand.vmem [shape: s32[32,4], index: 0, kind: input, shape index: {}]
  %s1 = inlined_call_operand.hbm [shape: f32[384,128], index: 1, kind: input, shape index: {}]
  %s2 = inlined_call_operand.hbm [shape: f32[32,128], index: 2, kind: output, shape index: {}]
  %s3 = sld [smem:[#allocation0]]
  $region22: #{tpu_custom_call.1} parent=0
    _
  %s5 = ssub.s32 1, %s3
  %s6 = scalar_select 0, %s5, %s3
  $region1: #{tpu_custom_call.1} parent=0
    #allocation2 [shape = 'u8[196608]{0}', space=vmem, size = 0x30000, scoped, tag = 'input window, operand 1, single buffered']
    #allocation3 [shape = 's32[1]{0}', space=sflag, size = 0x4, scoped, tag = 'scoped memory for tpu_custom_call.1']
    #allocation4 [shape = 's32[1]{0}', space=sflag, size = 0x4, scoped, tag = 'scoped memory for tpu_custom_call.1']
    #allocation5 [shape = 'u8[16384]{0}', space=vmem, size = 0x4000, scoped, tag = 'output window, operand 0, single buffered']
    %7 = vsyncpa [#allocation3], 0
    %8 = vsyncpa [#allocation4], 0
    // Predicated region
    $region2: #{tpu_custom_call.1} parent=1 // pred_check
      _
    $region3: #{tpu_custom_call.1} parent=1 // pred_check_branch
      %10 = sbr.rel (0) target = $region5
    $region4: #{tpu_custom_call.1} parent=1 // pred_region
      _
    $region5: #{tpu_custom_call.1} parent=1 // pred_fallthru
      _
    // Predicated region
    $region6: #{tpu_custom_call.1} parent=1 // pred_check
      _
    $region7: #{tpu_custom_call.1} parent=1 // pred_check_branch
      %12 = sbr.rel (0) target = $region9
    $region8: #{tpu_custom_call.1} parent=1 // pred_region
      %s14 = ssub.s32 6144, 6144
      %15 = vsyncadd [#allocation3], %s14
      %s16 = sshll.u32 [#allocation2], 4
      %s17 = int_to_ptr.vmem [resolvable:$true] %s16
      %22 = dma.hbm_to_vmem [thread:$0]  %s1, 6144, %s17, [#allocation3], 128, 128, 8
    $region9: #{tpu_custom_call.1} parent=1 // pred_fallthru
      _
    // Predicated region
    $region10: #{tpu_custom_call.1} parent=1 // pred_check
      _
    $region11: #{tpu_custom_call.1} parent=1 // pred_check_branch
      %24 = sbr.rel (0) target = $region13
    $region12: #{tpu_custom_call.1} parent=1 // pred_region
      %25 = dma.done [#allocation3], 6144
    $region13: #{tpu_custom_call.1} parent=1 // pred_fallthru
      _
    %v26 = vlaneseq
    %v27 = vand.u32 %v26, 127
    %v28 = vadd.s32 %v27, 128
    %v29 = vadd.s32 %v27, 256
    %v30 = vld [vmem:[%s0] sm:$0xff]
    %v31 = vld [vmem:[%s0 + $0x8] sm:$0xff]
    %v32 = vld [vmem:[%s0 + $0x10] sm:$0xff]
    %v33 = vld [vmem:[%s0 + $0x18] sm:$0xff]
    %34 = vset.pattern.permute.xlu0 0
    %35 = vperm.xlu0 %34, %v30
    %v36 = vpop.permute.xlu0 %35
    %37 = vset.pattern.permute.xlu0 0
    %38 = vperm.xlu0 %37, %v31
    %v39 = vpop.permute.xlu0 %38
    %40 = vset.pattern.permute.xlu0 0
    %41 = vperm.xlu0 %40, %v32
    %v42 = vpop.permute.xlu0 %41
    %43 = vset.pattern.permute.xlu0 0
    %44 = vperm.xlu0 %43, %v33
    %v45 = vpop.permute.xlu0 %44
    %vm46 = vcmp.eq.s32.totalorder %v27, %v36
    %vm47 = vcmp.eq.s32.totalorder %v28, %v36
    %vm48 = vcmp.eq.s32.totalorder %v29, %v36
    %vm49 = vcmp.eq.s32.totalorder %v27, %v39
    %vm50 = vcmp.eq.s32.totalorder %v28, %v39
    %vm51 = vcmp.eq.s32.totalorder %v29, %v39
    %vm52 = vcmp.eq.s32.totalorder %v27, %v42
    %vm53 = vcmp.eq.s32.totalorder %v28, %v42
    %vm54 = vcmp.eq.s32.totalorder %v29, %v42
    %vm55 = vcmp.eq.s32.totalorder %v27, %v45
    %vm56 = vcmp.eq.s32.totalorder %v28, %v45
    %vm57 = vcmp.eq.s32.totalorder %v29, %v45
    %58 = vset.pattern.permute.xlu0 1
    %59 = vperm.xlu0 %58, %v30
    %v60 = vpop.permute.xlu0 %59
    %61 = vset.pattern.permute.xlu0 1
    %62 = vperm.xlu0 %61, %v31
    %v63 = vpop.permute.xlu0 %62
    %64 = vset.pattern.permute.xlu0 1
    %65 = vperm.xlu0 %64, %v32
    %v66 = vpop.permute.xlu0 %65
    %67 = vset.pattern.permute.xlu0 1
    %68 = vperm.xlu0 %67, %v33
    %v69 = vpop.permute.xlu0 %68
    %vm70 = vcmp.eq.s32.totalorder %v27, %v60
    %vm71 = vcmp.eq.s32.totalorder %v28, %v60
    %vm72 = vcmp.eq.s32.totalorder %v29, %v60
    %vm73 = vcmp.eq.s32.totalorder %v27, %v63
    %vm74 = vcmp.eq.s32.totalorder %v28, %v63
    %vm75 = vcmp.eq.s32.totalorder %v29, %v63
    %vm76 = vcmp.eq.s32.totalorder %v27, %v66
    %vm77 = vcmp.eq.s32.totalorder %v28, %v66
    %vm78 = vcmp.eq.s32.totalorder %v29, %v66
    %vm79 = vcmp.eq.s32.totalorder %v27, %v69
    %vm80 = vcmp.eq.s32.totalorder %v28, %v69
    %vm81 = vcmp.eq.s32.totalorder %v29, %v69
    %vm82 = vmor %vm46, %vm70
    %vm83 = vmor %vm47, %vm71
    %vm84 = vmor %vm48, %vm72
    %vm85 = vmor %vm49, %vm73
    %vm86 = vmor %vm50, %vm74
    %vm87 = vmor %vm51, %vm75
    %vm88 = vmor %vm52, %vm76
    %vm89 = vmor %vm53, %vm77
    %vm90 = vmor %vm54, %vm78
    %vm91 = vmor %vm55, %vm79
    %vm92 = vmor %vm56, %vm80
    %vm93 = vmor %vm57, %vm81
    %94 = vset.pattern.permute.xlu0 2
    %95 = vperm.xlu0 %94, %v30
    %v96 = vpop.permute.xlu0 %95
    %97 = vset.pattern.permute.xlu0 2
    %98 = vperm.xlu0 %97, %v31
    %v99 = vpop.permute.xlu0 %98
    %100 = vset.pattern.permute.xlu0 2
    %101 = vperm.xlu0 %100, %v32
    %v102 = vpop.permute.xlu0 %101
    %103 = vset.pattern.permute.xlu0 2
    %104 = vperm.xlu0 %103, %v33
    %v105 = vpop.permute.xlu0 %104
    %vm106 = vcmp.eq.s32.totalorder %v27, %v96
    %vm107 = vcmp.eq.s32.totalorder %v28, %v96
    %vm108 = vcmp.eq.s32.totalorder %v29, %v96
    %vm109 = vcmp.eq.s32.totalorder %v27, %v99
    %vm110 = vcmp.eq.s32.totalorder %v28, %v99
    %vm111 = vcmp.eq.s32.totalorder %v29, %v99
    %vm112 = vcmp.eq.s32.totalorder %v27, %v102
    %vm113 = vcmp.eq.s32.totalorder %v28, %v102
    %vm114 = vcmp.eq.s32.totalorder %v29, %v102
    %vm115 = vcmp.eq.s32.totalorder %v27, %v105
    %vm116 = vcmp.eq.s32.totalorder %v28, %v105
    %vm117 = vcmp.eq.s32.totalorder %v29, %v105
    %vm118 = vmor %vm82, %vm106
    %vm119 = vmor %vm83, %vm107
    %vm120 = vmor %vm84, %vm108
    %vm121 = vmor %vm85, %vm109
    %vm122 = vmor %vm86, %vm110
    %vm123 = vmor %vm87, %vm111
    %vm124 = vmor %vm88, %vm112
    %vm125 = vmor %vm89, %vm113
    %vm126 = vmor %vm90, %vm114
    %vm127 = vmor %vm91, %vm115
    %vm128 = vmor %vm92, %vm116
    %vm129 = vmor %vm93, %vm117
    %130 = vset.pattern.permute.xlu0 3
    %131 = vperm.xlu0 %130, %v30
    %v132 = vpop.permute.xlu0 %131
    %133 = vset.pattern.permute.xlu0 3
    %134 = vperm.xlu0 %133, %v31
    %v135 = vpop.permute.xlu0 %134
    %136 = vset.pattern.permute.xlu0 3
    %137 = vperm.xlu0 %136, %v32
    %v138 = vpop.permute.xlu0 %137
    %139 = vset.pattern.permute.xlu0 3
    %140 = vperm.xlu0 %139, %v33
    %v141 = vpop.permute.xlu0 %140
    %vm142 = vcmp.eq.s32.totalorder %v27, %v132
    %vm143 = vcmp.eq.s32.totalorder %v28, %v132
    %vm144 = vcmp.eq.s32.totalorder %v29, %v132
    %vm145 = vcmp.eq.s32.totalorder %v27, %v135
    %vm146 = vcmp.eq.s32.totalorder %v28, %v135
    %vm147 = vcmp.eq.s32.totalorder %v29, %v135
    %vm148 = vcmp.eq.s32.totalorder %v27, %v138
    %vm149 = vcmp.eq.s32.totalorder %v28, %v138
    %vm150 = vcmp.eq.s32.totalorder %v29, %v138
    %vm151 = vcmp.eq.s32.totalorder %v27, %v141
    %vm152 = vcmp.eq.s32.totalorder %v28, %v141
    %vm153 = vcmp.eq.s32.totalorder %v29, %v141
    %vm154 = vmor %vm118, %vm142
    %vm155 = vmor %vm119, %vm143
    %vm156 = vmor %vm120, %vm144
    %vm157 = vmor %vm121, %vm145
    %vm158 = vmor %vm122, %vm146
    %vm159 = vmor %vm123, %vm147
    %vm160 = vmor %vm124, %vm148
    %vm161 = vmor %vm125, %vm149
    %vm162 = vmor %vm126, %vm150
    %vm163 = vmor %vm127, %vm151
    %vm164 = vmor %vm128, %vm152
    %vm165 = vmor %vm129, %vm153
    %v166 = vsel %vm154, 1, 0
    %v167 = vsel %vm155, 1, 0
    %v168 = vsel %vm156, 1, 0
    %v169 = vsel %vm157, 1, 0
    %v170 = vsel %vm158, 1, 0
    %v171 = vsel %vm159, 1, 0
    %v172 = vsel %vm160, 1, 0
    %v173 = vsel %vm161, 1, 0
    %v174 = vsel %vm162, 1, 0
    %v175 = vsel %vm163, 1, 0
    %v176 = vsel %vm164, 1, 0
    %v177 = vsel %vm165, 1, 0
    %v178 = vcvt.s32.f32 %v166
    %v179 = vcvt.s32.f32 %v167
    %v180 = vcvt.s32.f32 %v168
    %v181 = vcvt.s32.f32 %v169
    %v182 = vcvt.s32.f32 %v170
    %v183 = vcvt.s32.f32 %v171
    %v184 = vcvt.s32.f32 %v172
    %v185 = vcvt.s32.f32 %v173
    %v186 = vcvt.s32.f32 %v174
    %v187 = vcvt.s32.f32 %v175
    %v188 = vcvt.s32.f32 %v176
    %v189 = vcvt.s32.f32 %v177
    %v190 = vld [vmem:[#allocation2] sm:$0xff]
    %v191 = vld [vmem:[#allocation2 + $0x8] sm:$0xff]
    %v192 = vld [vmem:[#allocation2 + $0x10] sm:$0xff]
    %v193 = vld [vmem:[#allocation2 + $0x18] sm:$0xff]
    %v194 = vld [vmem:[#allocation2 + $0x20] sm:$0xff]
    %v195 = vld [vmem:[#allocation2 + $0x28] sm:$0xff]
    %v196 = vld [vmem:[#allocation2 + $0x30] sm:$0xff]
    %v197 = vld [vmem:[#allocation2 + $0x38] sm:$0xff]
    %v198 = vld [vmem:[#allocation2 + $0x40] sm:$0xff]
    %v199 = vld [vmem:[#allocation2 + $0x48] sm:$0xff]
    %v200 = vld [vmem:[#allocation2 + $0x50] sm:$0xff]
    %v201 = vld [vmem:[#allocation2 + $0x58] sm:$0xff]
    %v202 = vld [vmem:[#allocation2 + $0x60] sm:$0xff]
    %v203 = vld [vmem:[#allocation2 + $0x68] sm:$0xff]
    %v204 = vld [vmem:[#allocation2 + $0x70] sm:$0xff]
    %v205 = vld [vmem:[#allocation2 + $0x78] sm:$0xff]
    %v206 = vld [vmem:[#allocation2 + $0x80] sm:$0xff]
    %v207 = vld [vmem:[#allocation2 + $0x88] sm:$0xff]
    %v208 = vld [vmem:[#allocation2 + $0x90] sm:$0xff]
    %v209 = vld [vmem:[#allocation2 + $0x98] sm:$0xff]
    %v210 = vld [vmem:[#allocation2 + $0xa0] sm:$0xff]
    %v211 = vld [vmem:[#allocation2 + $0xa8] sm:$0xff]
    %v212 = vld [vmem:[#allocation2 + $0xb0] sm:$0xff]
    %v213 = vld [vmem:[#allocation2 + $0xb8] sm:$0xff]
    %v214 = vld [vmem:[#allocation2 + $0xc0] sm:$0xff]
    %v215 = vld [vmem:[#allocation2 + $0xc8] sm:$0xff]
    %v216 = vld [vmem:[#allocation2 + $0xd0] sm:$0xff]
    %v217 = vld [vmem:[#allocation2 + $0xd8] sm:$0xff]
    %v218 = vld [vmem:[#allocation2 + $0xe0] sm:$0xff]
    %v219 = vld [vmem:[#allocation2 + $0xe8] sm:$0xff]
    %v220 = vld [vmem:[#allocation2 + $0xf0] sm:$0xff]
    %v221 = vld [vmem:[#allocation2 + $0xf8] sm:$0xff]
    %v222 = vld [vmem:[#allocation2 + $0x100] sm:$0xff]
    %v223 = vld [vmem:[#allocation2 + $0x108] sm:$0xff]
    %v224 = vld [vmem:[#allocation2 + $0x110] sm:$0xff]
    %v225 = vld [vmem:[#allocation2 + $0x118] sm:$0xff]
    %v226 = vld [vmem:[#allocation2 + $0x120] sm:$0xff]
    %v227 = vld [vmem:[#allocation2 + $0x128] sm:$0xff]
    %v228 = vld [vmem:[#allocation2 + $0x130] sm:$0xff]
    %v229 = vld [vmem:[#allocation2 + $0x138] sm:$0xff]
    %v230 = vld [vmem:[#allocation2 + $0x140] sm:$0xff]
    %v231 = vld [vmem:[#allocation2 + $0x148] sm:$0xff]
    %v232 = vld [vmem:[#allocation2 + $0x150] sm:$0xff]
    %v233 = vld [vmem:[#allocation2 + $0x158] sm:$0xff]
    %v234 = vld [vmem:[#allocation2 + $0x160] sm:$0xff]
    %v235 = vld [vmem:[#allocation2 + $0x168] sm:$0xff]
    %v236 = vld [vmem:[#allocation2 + $0x170] sm:$0xff]
    %v237 = vld [vmem:[#allocation2 + $0x178] sm:$0xff]
    %238 = vmatprep.subr.mxu0 0.0
    %239 = vmatpush1.msra.mxu0 %v205
    %240 = vmatprep.subr.mxu0 0.0
    %241 = vmatpush1.msra.mxu0 %v204
    %242 = vmatprep.subr.mxu0 0.0
    %243 = vmatpush1.msra.mxu0 %v203
    %244 = vmatprep.subr.mxu0 0.0
    %245 = vmatpush1.msra.mxu0 %v202
    %246 = vmatprep.subr.mxu0 0.0
    %247 = vmatpush1.msra.mxu0 %v201
    %248 = vmatprep.subr.mxu0 0.0
    %249 = vmatpush1.msra.mxu0 %v200
    %250 = vmatprep.subr.mxu0 0.0
    %251 = vmatpush1.msra.mxu0 %v199
    %252 = vmatprep.subr.mxu0 0.0
    %253 = vmatpush1.msra.mxu0 %v198
    %254 = vmatprep.subr.mxu0 0.0
    %255 = vmatpush1.msra.mxu0 %v197
    %256 = vmatprep.subr.mxu0 0.0
    %257 = vmatpush1.msra.mxu0 %v196
    %258 = vmatprep.subr.mxu0 0.0
    %259 = vmatpush1.msra.mxu0 %v195
    %260 = vmatprep.subr.mxu0 0.0
    %261 = vmatpush1.msra.mxu0 %v194
    %262 = vmatprep.subr.mxu0 0.0
    %263 = vmatpush1.msra.mxu0 %v193
    %264 = vmatprep.subr.mxu0 0.0
    %265 = vmatpush1.msra.mxu0 %v192
    %266 = vmatprep.subr.mxu0 0.0
    %267 = vmatpush1.msra.mxu0 %v191
    %268 = vmatprep.subr.mxu0 0.0
    %269 = vmatpush1.msra.mxu0 %v190
    %270 = vmatprep.subr.mxu0 0.0
    %271 = vmatpush2.msra.mxu0 %v221
    %272 = vmatprep.subr.mxu0 0.0
    %273 = vmatpush2.msra.mxu0 %v220
    %274 = vmatprep.subr.mxu0 0.0
    %275 = vmatpush2.msra.mxu0 %v219
    %276 = vmatprep.subr.mxu0 0.0
    %277 = vmatpush2.msra.mxu0 %v218
    %278 = vmatprep.subr.mxu0 0.0
    %279 = vmatpush2.msra.mxu0 %v217
    %280 = vmatprep.subr.mxu0 0.0
    %281 = vmatpush2.msra.mxu0 %v216
    %282 = vmatprep.subr.mxu0 0.0
    %283 = vmatpush2.msra.mxu0 %v215
    %284 = vmatprep.subr.mxu0 0.0
    %285 = vmatpush2.msra.mxu0 %v214
    %286 = vmatprep.subr.mxu0 0.0
    %287 = vmatpush2.msra.mxu0 %v213
    %288 = vmatprep.subr.mxu0 0.0
    %289 = vmatpush2.msra.mxu0 %v212
    %290 = vmatprep.subr.mxu0 0.0
    %291 = vmatpush2.msra.mxu0 %v211
    %292 = vmatprep.subr.mxu0 0.0
    %293 = vmatpush2.msra.mxu0 %v210
    %294 = vmatprep.subr.mxu0 0.0
    %295 = vmatpush2.msra.mxu0 %v209
    %296 = vmatprep.subr.mxu0 0.0
    %297 = vmatpush2.msra.mxu0 %v208
    %298 = vmatprep.subr.mxu0 0.0
    %299 = vmatpush2.msra.mxu0 %v207
    %300 = vmatprep.subr.mxu0 0.0
    %301 = vmatpush2.msra.mxu0 %v206
    %302 = vmatprep.mubr.f32.mxu0 %v179
    %303 = vmatmul.mubr.f32.gmra.mxu0 %v178
    %v304 = vpop.f32.mrf.mxu0
    %v305 = vadd.f32 0.0, %v304
    %v306 = vpop.f32.mrf.mxu0
    %307 = vmatprep.mubr.f32.mxu0 %v182
    %308 = vmatmul.mubr.f32.gmra.mxu0 %v181
    %v309 = vpop.f32.mrf.mxu0
    %v310 = vadd.f32 0.0, %v309
    %v311 = vpop.f32.mrf.mxu0
    %312 = vmatprep.mubr.f32.mxu0 %v185
    %313 = vmatmul.mubr.f32.gmra.mxu0 %v184
    %v314 = vpop.f32.mrf.mxu0
    %v315 = vadd.f32 0.0, %v314
    %v316 = vpop.f32.mrf.mxu0
    %317 = vmatprep.mubr.f32.mxu0 %v188
    %318 = vmatmul.mubr.f32.gmra.mxu0 %v187
    %v319 = vpop.f32.mrf.mxu0
    %v320 = vadd.f32 0.0, %v319
    %v321 = vpop.f32.mrf.mxu0
    %322 = vdwg.mxu0
    %323 = vmatprep.subr.mxu0 0.0
    %324 = vmatpush1.msra.mxu0 %v237
    %325 = vmatprep.subr.mxu0 0.0
    %326 = vmatpush1.msra.mxu0 %v236
    %327 = vmatprep.subr.mxu0 0.0
    %328 = vmatpush1.msra.mxu0 %v235
    %329 = vmatprep.subr.mxu0 0.0
    %330 = vmatpush1.msra.mxu0 %v234
    %331 = vmatprep.subr.mxu0 0.0
    %332 = vmatpush1.msra.mxu0 %v233
    %333 = vmatprep.subr.mxu0 0.0
    %334 = vmatpush1.msra.mxu0 %v232
    %335 = vmatprep.subr.mxu0 0.0
    %336 = vmatpush1.msra.mxu0 %v231
    %337 = vmatprep.subr.mxu0 0.0
    %338 = vmatpush1.msra.mxu0 %v230
    %339 = vmatprep.subr.mxu0 0.0
    %340 = vmatpush1.msra.mxu0 %v229
    %341 = vmatprep.subr.mxu0 0.0
    %342 = vmatpush1.msra.mxu0 %v228
    %343 = vmatprep.subr.mxu0 0.0
    %344 = vmatpush1.msra.mxu0 %v227
    %345 = vmatprep.subr.mxu0 0.0
    %346 = vmatpush1.msra.mxu0 %v226
    %347 = vmatprep.subr.mxu0 0.0
    %348 = vmatpush1.msra.mxu0 %v225
    %349 = vmatprep.subr.mxu0 0.0
    %350 = vmatpush1.msra.mxu0 %v224
    %351 = vmatprep.subr.mxu0 0.0
    %352 = vmatpush1.msra.mxu0 %v223
    %353 = vmatprep.subr.mxu0 0.0
    %354 = vmatpush1.msra.mxu0 %v222
    %355 = vmatprep.subr.mxu0 0.0
    %356 = vmatpush2.msra.mxu0 0.0
    %357 = vmatprep.subr.mxu0 0.0
    %358 = vmatpush2.msra.mxu0 0.0
    %359 = vmatprep.subr.mxu0 0.0
    %360 = vmatpush2.msra.mxu0 0.0
    %361 = vmatprep.subr.mxu0 0.0
    %362 = vmatpush2.msra.mxu0 0.0
    %363 = vmatprep.subr.mxu0 0.0
    %364 = vmatpush2.msra.mxu0 0.0
    %365 = vmatprep.subr.mxu0 0.0
    %366 = vmatpush2.msra.mxu0 0.0
    %367 = vmatprep.subr.mxu0 0.0
    %368 = vmatpush2.msra.mxu0 0.0
    %369 = vmatprep.subr.mxu0 0.0
    %370 = vmatpush2.msra.mxu0 0.0
    %371 = vmatprep.subr.mxu0 0.0
    %372 = vmatpush2.msra.mxu0 0.0
    %373 = vmatprep.subr.mxu0 0.0
    %374 = vmatpush2.msra.mxu0 0.0
    %375 = vmatprep.subr.mxu0 0.0
    %376 = vmatpush2.msra.mxu0 0.0
    %377 = vmatprep.subr.mxu0 0.0
    %378 = vmatpush2.msra.mxu0 0.0
    %379 = vmatprep.subr.mxu0 0.0
    %380 = vmatpush2.msra.mxu0 0.0
    %381 = vmatprep.subr.mxu0 0.0
    %382 = vmatpush2.msra.mxu0 0.0
    %383 = vmatprep.subr.mxu0 0.0
    %384 = vmatpush2.msra.mxu0 0.0
    %385 = vmatprep.subr.mxu0 0.0
    %386 = vmatpush2.msra.mxu0 0.0
    %387 = vmatprep.mubr.f32.mxu0 0.0
    %388 = vmatmul.mubr.f32.gmra.mxu0 %v180
    %v389 = vpop.f32.mrf.mxu0
    %v390 = vadd.f32 %v305, %v389
    %v391 = vpop.f32.mrf.mxu0
    %392 = vmatprep.mubr.f32.mxu0 0.0
    %393 = vmatmul.mubr.f32.gmra.mxu0 %v183
    %v394 = vpop.f32.mrf.mxu0
    %v395 = vadd.f32 %v310, %v394
    %v396 = vpop.f32.mrf.mxu0
    %397 = vmatprep.mubr.f32.mxu0 0.0
    %398 = vmatmul.mubr.f32.gmra.mxu0 %v186
    %v399 = vpop.f32.mrf.mxu0
    %v400 = vadd.f32 %v315, %v399
    %v401 = vpop.f32.mrf.mxu0
    %402 = vmatprep.mubr.f32.mxu0 0.0
    %403 = vmatmul.mubr.f32.gmra.mxu0 %v189
    %v404 = vpop.f32.mrf.mxu0
    %v405 = vadd.f32 %v320, %v404
    %v406 = vpop.f32.mrf.mxu0
    %407 = vdwg.mxu0
    %408 = vst [vmem:[#allocation5] sm:$0xff] %v390
    %409 = vst [vmem:[#allocation5 + $0x8] sm:$0xff] %v395
    %410 = vst [vmem:[#allocation5 + $0x10] sm:$0xff] %v400
    %411 = vst [vmem:[#allocation5 + $0x18] sm:$0xff] %v405
    // Predicated region
    $region14: #{tpu_custom_call.1} parent=1 // pred_check
      _
    $region15: #{tpu_custom_call.1} parent=1 // pred_check_branch
      %413 = sbr.rel (0) target = $region17
    $region16: #{tpu_custom_call.1} parent=1 // pred_region
      %s415 = ssub.s32 512, 512
      %416 = vsyncadd [#allocation4], %s415
      %s417 = sshll.u32 [#allocation5], 4
      %s418 = int_to_ptr.vmem [resolvable:$true] %s417
      %423 = dma.vmem_to_hbm [thread:$0]  %s418, 512, %s2, [#allocation4], 128, 128, 8
    $region17: #{tpu_custom_call.1} parent=1 // pred_fallthru
      _
    // Predicated region
    $region18: #{tpu_custom_call.1} parent=1 // pred_check
      _
    $region19: #{tpu_custom_call.1} parent=1 // pred_check_branch
      %425 = sbr.rel (0) target = $region21
    $region20: #{tpu_custom_call.1} parent=1 // pred_region
      %426 = dma.done [#allocation4], 512
    $region21: #{tpu_custom_call.1} parent=1 // pred_fallthru
      _
    %427 = vsyncpa [#allocation3], 1
    %428 = vsyncpa [#allocation4], 1

</llo_original>
